<compile_context>
chip_gen: v6e
topology: v6e:2x2x1
jax: 0.10.0
libtpu: 0.0.40
codegen_flags: <defaults>
</compile_context>

<pallas_src>
import functools
import math

import jax
import jax.numpy as jnp
from jax import lax
from jax.experimental import pallas as pl
from jax.experimental.pallas import tpu as pltpu


def _nt_xent_kernel(emb_i_row_ref, emb_j_row_ref, emb_i_col_ref, emb_j_col_ref,
                    out_ref, denom_i_ref, denom_j_ref,
                    *, inv_temperature, matmul_dtype):
    """Row block r (parallel) x column block c (reduction, last grid axis)."""
    c = pl.program_id(1)

    @pl.when(c == 0)
    def _init():
        denom_i_ref[...] = jnp.zeros_like(denom_i_ref)
        denom_j_ref[...] = jnp.zeros_like(denom_j_ref)

    def l2norm(x):
        # F.normalize(x, dim=1): x / max(||x||, 1e-12) == x * rsqrt(max(||x||^2, 1e-24))
        ss = jnp.sum(x * x, axis=1, keepdims=True)
        return x * lax.rsqrt(jnp.maximum(ss, 1e-24))

    zi_r = l2norm(emb_i_row_ref[...].astype(jnp.float32))   # (TM, D)
    zj_r = l2norm(emb_j_row_ref[...].astype(jnp.float32))   # (TM, D)
    zi_c = l2norm(emb_i_col_ref[...].astype(jnp.float32))   # (TN, D)
    zj_c = l2norm(emb_j_col_ref[...].astype(jnp.float32))   # (TN, D)

    it = inv_temperature
    dn = (((1,), (1,)), ((), ()))   # contract dim 1 with dim 1 — no transposed copy

    a_i = zi_r.astype(matmul_dtype)
    a_j = zj_r.astype(matmul_dtype)
    b_i = zi_c.astype(matmul_dtype)
    b_j = zj_c.astype(matmul_dtype)

    # 2x2 quadrants of the similarity matrix for this (row, col) tile. Rows are
    # already unit-norm, so sim == dot products (no second normalization).
    s_ii = lax.dot_general(a_i, b_i, dn, preferred_element_type=jnp.float32)
    s_ij = lax.dot_general(a_i, b_j, dn, preferred_element_type=jnp.float32)
    s_ji = lax.dot_general(a_j, b_i, dn, preferred_element_type=jnp.float32)
    s_jj = lax.dot_general(a_j, b_j, dn, preferred_element_type=jnp.float32)

    # Partial softmax denominators (including the diagonal, corrected at finalize).
    denom_i_ref[...] += jnp.sum(jnp.exp(s_ii * it) + jnp.exp(s_ij * it),
                                axis=1, keepdims=True)
    denom_j_ref[...] += jnp.sum(jnp.exp(s_ji * it) + jnp.exp(s_jj * it),
                                axis=1, keepdims=True)

    @pl.when(c == pl.num_programs(1) - 1)
    def _finalize():
        # positives: sim[k, k+B] == sim[k+B, k] == z_i[k] . z_j[k] — serves both halves.
        pos = jnp.sum(zi_r * zj_r, axis=1, keepdims=True)          # (TM, 1)
        # negatives_mask = 1 - eye: diag(sim) == 1 after normalization, so subtract
        # exp(1/t) analytically instead of multiplying by an N x N mask.
        diag = jnp.float32(math.exp(inv_temperature))
        # Log-domain loss: -log(exp(pos/t) / denom) == log(denom) - pos/t
        li = jnp.log(denom_i_ref[...] - diag) - pos * it           # first-half rows
        lj = jnp.log(denom_j_ref[...] - diag) - pos * it           # second-half rows
        out_ref[:, 0:1] = li
        out_ref[:, 1:2] = lj


def _pick_block(batch_size, requested=None, max_block=256):
    if requested is not None:
        if batch_size % requested == 0 and (requested % 8 == 0 or requested == batch_size):
            return requested
        raise ValueError(f"block_size={requested} incompatible with batch_size={batch_size}")
    if batch_size <= max_block:
        return batch_size
    for t in range(max_block, 0, -8):
        if batch_size % t == 0:
            return t
    # TODO(synk): batch sizes with no multiple-of-8 divisor fall back to a single
    # (large) row/col block instead of ragged tiling.
    return batch_size


def contrastive_loss(emb_i, emb_j, batch_size, temperature=0.5,
                     block_size=None, matmul_dtype=jnp.float32):
    B, D = emb_i.shape
    assert emb_j.shape == (B, D)
    assert B == batch_size, "module is constructed for a fixed batch_size"

    # Lane-align the feature dim: zero padding changes neither norms nor dots.
    d_pad = (-D) % 128
    if d_pad:
        emb_i = jnp.pad(emb_i, ((0, 0), (0, d_pad)))
        emb_j = jnp.pad(emb_j, ((0, 0), (0, d_pad)))
    Dp = D + d_pad

    tm = _pick_block(B, block_size)
    rb = B // tm

    kernel = functools.partial(
        _nt_xent_kernel,
        inv_temperature=1.0 / float(temperature),
        matmul_dtype=matmul_dtype,
    )

    row_spec = pl.BlockSpec((tm, Dp), lambda r, c: (r, 0))
    col_spec = pl.BlockSpec((tm, Dp), lambda r, c: (c, 0))

    per_row = pl.pallas_call(
        kernel,
        out_shape=jax.ShapeDtypeStruct((B, 2), jnp.float32),
        grid_spec=pltpu.PrefetchScalarGridSpec(
            num_scalar_prefetch=0,
            grid=(rb, rb),
            in_specs=[row_spec, row_spec, col_spec, col_spec],
            out_specs=pl.BlockSpec((tm, 2), lambda r, c: (r, 0)),
            scratch_shapes=[
                pltpu.VMEM((tm, 1), jnp.float32),   # denominator accumulator, first half
                pltpu.VMEM((tm, 1), jnp.float32),   # denominator accumulator, second half
            ],
        ),
        compiler_params=pltpu.CompilerParams(
            dimension_semantics=("parallel", "arbitrary"),
        ),
    )(emb_i, emb_j, emb_i, emb_j)

    # per_row[:, 0] = loss rows of the first half, per_row[:, 1] = second half.
    return jnp.sum(per_row) / (2.0 * batch_size)


def _reference_loss(emb_i, emb_j, batch_size, temperature=0.5):
    # Pure-JAX reference mirroring the PyTorch module exactly.
    def l2norm(x):
        n = jnp.sqrt(jnp.sum(x * x, axis=1, keepdims=True))
        return x / jnp.maximum(n, 1e-12)

    z = jnp.concatenate([l2norm(emb_i), l2norm(emb_j)], axis=0)
    norms = jnp.sqrt(jnp.sum(z * z, axis=1, keepdims=True))
    sim = (z @ z.T) / jnp.maximum(norms * norms.T, 1e-8)
    N = 2 * batch_size
    idx = jnp.arange(N)
    positives = sim[idx, (idx + batch_size) % N]
    neg_mask = 1.0 - jnp.eye(N)
    nominator = jnp.exp(positives / temperature)
    denominator = jnp.sum(neg_mask * jnp.exp(sim / temperature), axis=1)
    return jnp.sum(-jnp.log(nominator / denominator)) / (2 * batch_size)


if __name__ == "__main__":
    batch_size = 16
    hidden = 32
    temperature = 0.5

    key = jax.random.PRNGKey(0)
    k1, k2 = jax.random.split(key)
    emb_i = jax.random.normal(k1, (batch_size, hidden), dtype=jnp.float32)
    emb_j = jax.random.normal(k2, (batch_size, hidden), dtype=jnp.float32)

    ref = _reference_loss(emb_i, emb_j, batch_size, temperature)

    # Tiled path (2x2 grid: parallel row blocks, reduction over column blocks).
    loss = contrastive_loss(emb_i, emb_j, batch_size, temperature, block_size=8)
    loss = jax.block_until_ready(loss)
    assert jnp.allclose(loss, ref, atol=1e-4, rtol=1e-4), (loss, ref)

    # Single-block path (auto block size).
    loss_1b = jax.block_until_ready(
        contrastive_loss(emb_i, emb_j, batch_size, temperature))
    assert jnp.allclose(loss_1b, ref, atol=1e-4, rtol=1e-4), (loss_1b, ref)

    # bf16 MXU fast path (f32 accumulation).
    loss_bf16 = jax.block_until_ready(
        contrastive_loss(emb_i, emb_j, batch_size, temperature,
                         block_size=8, matmul_dtype=jnp.bfloat16))
    assert jnp.allclose(loss_bf16, ref, atol=5e-2, rtol=5e-2), (loss_bf16, ref)

    print("KERNEL_OK")
</pallas_src>

<mosaic_0001>
module attributes {stable_mosaic.version = 11 : i64} {
  func.func @_nt_xent_kernel(%arg0: i32, %arg1: i32, %arg2: memref<8x128xf32, #tpu.memory_space<vmem>>, %arg3: memref<8x128xf32, #tpu.memory_space<vmem>>, %arg4: memref<8x128xf32, #tpu.memory_space<vmem>>, %arg5: memref<8x128xf32, #tpu.memory_space<vmem>>, %arg6: memref<8x2xf32, #tpu.memory_space<vmem>>, %arg7: memref<8x1xf32, #tpu.memory_space<vmem>>, %arg8: memref<8x1xf32, #tpu.memory_space<vmem>>) attributes {dimension_semantics = [#tpu.dimension_semantics<parallel>, #tpu.dimension_semantics<arbitrary>], iteration_bounds = array<i64: 2, 2>, scalar_prefetch = 0 : i64, scratch_operands = 2 : i64, tpu.core_type = #tpu.core_type<tc>, window_params = [{transform_indices = @transform_0, window_bounds = array<i64: 8, 128>}, {transform_indices = @transform_1, window_bounds = array<i64: 8, 128>}, {transform_indices = @transform_2, window_bounds = array<i64: 8, 128>}, {transform_indices = @transform_3, window_bounds = array<i64: 8, 128>}, {transform_indices = @transform_4, window_bounds = array<i64: 8, 2>}]} {
    %c0_i32 = arith.constant 0 : i32
    %0 = arith.cmpi eq, %arg1, %c0_i32 : i32
    %1 = arith.extui %0 : i1 to i32
    %c0_i32_0 = arith.constant 0 : i32
    %2 = arith.cmpi ne, %1, %c0_i32_0 : i32
    scf.if %2 {
      %cst_34 = arith.constant 0.000000e+00 : f32
      %70 = vector.broadcast %cst_34 : f32 to vector<8x1xf32>
      %c0_35 = arith.constant 0 : index
      %c0_36 = arith.constant 0 : index
      %71 = vector.load %arg7[%c0_35, %c0_36] : memref<8x1xf32, #tpu.memory_space<vmem>>, vector<8x1xf32>
      tpu.vector_store %arg7[%c0_35, %c0_36], %70 {strides = array<i32>} : memref<8x1xf32, #tpu.memory_space<vmem>>, vector<8x1xf32>,
      %cst_37 = arith.constant 0.000000e+00 : f32
      %72 = vector.broadcast %cst_37 : f32 to vector<8x1xf32>
      %c0_38 = arith.constant 0 : index
      %c0_39 = arith.constant 0 : index
      %73 = vector.load %arg8[%c0_38, %c0_39] : memref<8x1xf32, #tpu.memory_space<vmem>>, vector<8x1xf32>
      tpu.vector_store %arg8[%c0_38, %c0_39], %72 {strides = array<i32>} : memref<8x1xf32, #tpu.memory_space<vmem>>, vector<8x1xf32>,
    } else {
    }
    %c0 = arith.constant 0 : index
    %c0_1 = arith.constant 0 : index
    %3 = vector.load %arg2[%c0, %c0_1] : memref<8x128xf32, #tpu.memory_space<vmem>>, vector<8x128xf32>
    %4 = arith.mulf %3, %3 : vector<8x128xf32>
    %cst = arith.constant dense<0.000000e+00> : vector<8xf32>
    %5 = vector.multi_reduction <add>, %4, %cst [1] : vector<8x128xf32> to vector<8xf32>
    %6 = vector.shape_cast %5 : vector<8xf32> to vector<8x1xf32>
    %cst_2 = arith.constant 1.000000e-24 : f32
    %7 = vector.broadcast %cst_2 : f32 to vector<8x1xf32>
    %8 = arith.maximumf %6, %7 : vector<8x1xf32>
    %9 = math.rsqrt %8 : vector<8x1xf32>
    %10 = vector.broadcast %9 : vector<8x1xf32> to vector<8x128xf32>
    %11 = arith.mulf %3, %10 : vector<8x128xf32>
    %c0_3 = arith.constant 0 : index
    %c0_4 = arith.constant 0 : index
    %12 = vector.load %arg3[%c0_3, %c0_4] : memref<8x128xf32, #tpu.memory_space<vmem>>, vector<8x128xf32>
    %13 = arith.mulf %12, %12 : vector<8x128xf32>
    %cst_5 = arith.constant dense<0.000000e+00> : vector<8xf32>
    %14 = vector.multi_reduction <add>, %13, %cst_5 [1] : vector<8x128xf32> to vector<8xf32>
    %15 = vector.shape_cast %14 : vector<8xf32> to vector<8x1xf32>
    %cst_6 = arith.constant 1.000000e-24 : f32
    %16 = vector.broadcast %cst_6 : f32 to vector<8x1xf32>
    %17 = arith.maximumf %15, %16 : vector<8x1xf32>
    %18 = math.rsqrt %17 : vector<8x1xf32>
    %19 = vector.broadcast %18 : vector<8x1xf32> to vector<8x128xf32>
    %20 = arith.mulf %12, %19 : vector<8x128xf32>
    %c0_7 = arith.constant 0 : index
    %c0_8 = arith.constant 0 : index
    %21 = vector.load %arg4[%c0_7, %c0_8] : memref<8x128xf32, #tpu.memory_space<vmem>>, vector<8x128xf32>
    %22 = arith.mulf %21, %21 : vector<8x128xf32>
    %cst_9 = arith.constant dense<0.000000e+00> : vector<8xf32>
    %23 = vector.multi_reduction <add>, %22, %cst_9 [1] : vector<8x128xf32> to vector<8xf32>
    %24 = vector.shape_cast %23 : vector<8xf32> to vector<8x1xf32>
    %cst_10 = arith.constant 1.000000e-24 : f32
    %25 = vector.broadcast %cst_10 : f32 to vector<8x1xf32>
    %26 = arith.maximumf %24, %25 : vector<8x1xf32>
    %27 = math.rsqrt %26 : vector<8x1xf32>
    %28 = vector.broadcast %27 : vector<8x1xf32> to vector<8x128xf32>
    %29 = arith.mulf %21, %28 : vector<8x128xf32>
    %c0_11 = arith.constant 0 : index
    %c0_12 = arith.constant 0 : index
    %30 = vector.load %arg5[%c0_11, %c0_12] : memref<8x128xf32, #tpu.memory_space<vmem>>, vector<8x128xf32>
    %31 = arith.mulf %30, %30 : vector<8x128xf32>
    %cst_13 = arith.constant dense<0.000000e+00> : vector<8xf32>
    %32 = vector.multi_reduction <add>, %31, %cst_13 [1] : vector<8x128xf32> to vector<8xf32>
    %33 = vector.shape_cast %32 : vector<8xf32> to vector<8x1xf32>
    %cst_14 = arith.constant 1.000000e-24 : f32
    %34 = vector.broadcast %cst_14 : f32 to vector<8x1xf32>
    %35 = arith.maximumf %33, %34 : vector<8x1xf32>
    %36 = math.rsqrt %35 : vector<8x1xf32>
    %37 = vector.broadcast %36 : vector<8x1xf32> to vector<8x128xf32>
    %38 = arith.mulf %30, %37 : vector<8x128xf32>
    %cst_15 = arith.constant dense<0.000000e+00> : vector<8x8xf32>
    %39 = tpu.matmul %11, %29, %cst_15 {dimension_numbers = #tpu.dot_dimension_numbers<[1], [1], [0], [0], [0, 0, 1, 0], [], []>} : vector<8x128xf32>, vector<8x128xf32>, vector<8x8xf32> -> vector<8x8xf32>
    %cst_16 = arith.constant dense<0.000000e+00> : vector<8x8xf32>
    %40 = tpu.matmul %11, %38, %cst_16 {dimension_numbers = #tpu.dot_dimension_numbers<[1], [1], [0], [0], [0, 0, 1, 0], [], []>} : vector<8x128xf32>, vector<8x128xf32>, vector<8x8xf32> -> vector<8x8xf32>
    %cst_17 = arith.constant dense<0.000000e+00> : vector<8x8xf32>
    %41 = tpu.matmul %20, %29, %cst_17 {dimension_numbers = #tpu.dot_dimension_numbers<[1], [1], [0], [0], [0, 0, 1, 0], [], []>} : vector<8x128xf32>, vector<8x128xf32>, vector<8x8xf32> -> vector<8x8xf32>
    %cst_18 = arith.constant dense<0.000000e+00> : vector<8x8xf32>
    %42 = tpu.matmul %20, %38, %cst_18 {dimension_numbers = #tpu.dot_dimension_numbers<[1], [1], [0], [0], [0, 0, 1, 0], [], []>} : vector<8x128xf32>, vector<8x128xf32>, vector<8x8xf32> -> vector<8x8xf32>
    %c0_19 = arith.constant 0 : index
    %c0_20 = arith.constant 0 : index
    %43 = vector.load %arg7[%c0_19, %c0_20] : memref<8x1xf32, #tpu.memory_space<vmem>>, vector<8x1xf32>
    %cst_21 = arith.constant 2.000000e+00 : f32
    %44 = vector.broadcast %cst_21 : f32 to vector<8x8xf32>
    %45 = arith.mulf %39, %44 : vector<8x8xf32>
    %46 = math.exp %45 : vector<8x8xf32>
    %cst_22 = arith.constant 2.000000e+00 : f32
    %47 = vector.broadcast %cst_22 : f32 to vector<8x8xf32>
    %48 = arith.mulf %40, %47 : vector<8x8xf32>
    %49 = math.exp %48 : vector<8x8xf32>
    %50 = arith.addf %46, %49 : vector<8x8xf32>
    %cst_23 = arith.constant dense<0.000000e+00> : vector<8xf32>
    %51 = vector.multi_reduction <add>, %50, %cst_23 [1] : vector<8x8xf32> to vector<8xf32>
    %52 = vector.shape_cast %51 : vector<8xf32> to vector<8x1xf32>
    %53 = arith.addf %43, %52 : vector<8x1xf32>
    %c0_24 = arith.constant 0 : index
    %c0_25 = arith.constant 0 : index
    %54 = vector.load %arg7[%c0_24, %c0_25] : memref<8x1xf32, #tpu.memory_space<vmem>>, vector<8x1xf32>
    tpu.vector_store %arg7[%c0_24, %c0_25], %53 {strides = array<i32>} : memref<8x1xf32, #tpu.memory_space<vmem>>, vector<8x1xf32>,
    %c0_26 = arith.constant 0 : index
    %c0_27 = arith.constant 0 : index
    %55 = vector.load %arg8[%c0_26, %c0_27] : memref<8x1xf32, #tpu.memory_space<vmem>>, vector<8x1xf32>
    %cst_28 = arith.constant 2.000000e+00 : f32
    %56 = vector.broadcast %cst_28 : f32 to vector<8x8xf32>
    %57 = arith.mulf %41, %56 : vector<8x8xf32>
    %58 = math.exp %57 : vector<8x8xf32>
    %cst_29 = arith.constant 2.000000e+00 : f32
    %59 = vector.broadcast %cst_29 : f32 to vector<8x8xf32>
    %60 = arith.mulf %42, %59 : vector<8x8xf32>
    %61 = math.exp %60 : vector<8x8xf32>
    %62 = arith.addf %58, %61 : vector<8x8xf32>
    %cst_30 = arith.constant dense<0.000000e+00> : vector<8xf32>
    %63 = vector.multi_reduction <add>, %62, %cst_30 [1] : vector<8x8xf32> to vector<8xf32>
    %64 = vector.shape_cast %63 : vector<8xf32> to vector<8x1xf32>
    %65 = arith.addf %55, %64 : vector<8x1xf32>
    %c0_31 = arith.constant 0 : index
    %c0_32 = arith.constant 0 : index
    %66 = vector.load %arg8[%c0_31, %c0_32] : memref<8x1xf32, #tpu.memory_space<vmem>>, vector<8x1xf32>
    tpu.vector_store %arg8[%c0_31, %c0_32], %65 {strides = array<i32>} : memref<8x1xf32, #tpu.memory_space<vmem>>, vector<8x1xf32>,
    %c1_i32 = arith.constant 1 : i32
    %67 = arith.cmpi eq, %arg1, %c1_i32 : i32
    %68 = arith.extui %67 : i1 to i32
    %c0_i32_33 = arith.constant 0 : i32
    %69 = arith.cmpi ne, %68, %c0_i32_33 : i32
    scf.if %69 {
      %70 = arith.mulf %11, %20 : vector<8x128xf32>
      %cst_34 = arith.constant dense<0.000000e+00> : vector<8xf32>
      %71 = vector.multi_reduction <add>, %70, %cst_34 [1] : vector<8x128xf32> to vector<8xf32>
      %72 = vector.shape_cast %71 : vector<8xf32> to vector<8x1xf32>
      %c0_35 = arith.constant 0 : index
      %c0_36 = arith.constant 0 : index
      %73 = vector.load %arg7[%c0_35, %c0_36] : memref<8x1xf32, #tpu.memory_space<vmem>>, vector<8x1xf32>
      %cst_37 = arith.constant 7.3890562 : f32
      %74 = vector.broadcast %cst_37 : f32 to vector<8x1xf32>
      %75 = arith.subf %73, %74 : vector<8x1xf32>
      %76 = math.log %75 : vector<8x1xf32>
      %cst_38 = arith.constant 2.000000e+00 : f32
      %77 = vector.broadcast %cst_38 : f32 to vector<8x1xf32>
      %78 = arith.mulf %72, %77 : vector<8x1xf32>
      %79 = arith.subf %76, %78 : vector<8x1xf32>
      %c0_39 = arith.constant 0 : index
      %c0_40 = arith.constant 0 : index
      %80 = vector.load %arg8[%c0_39, %c0_40] : memref<8x1xf32, #tpu.memory_space<vmem>>, vector<8x1xf32>
      %cst_41 = arith.constant 7.3890562 : f32
      %81 = vector.broadcast %cst_41 : f32 to vector<8x1xf32>
      %82 = arith.subf %80, %81 : vector<8x1xf32>
      %83 = math.log %82 : vector<8x1xf32>
      %cst_42 = arith.constant 2.000000e+00 : f32
      %84 = vector.broadcast %cst_42 : f32 to vector<8x1xf32>
      %85 = arith.mulf %72, %84 : vector<8x1xf32>
      %86 = arith.subf %83, %85 : vector<8x1xf32>
      %c0_43 = arith.constant 0 : index
      %c0_44 = arith.constant 0 : index
      %87 = vector.load %arg6[%c0_43, %c0_44] : memref<8x2xf32, #tpu.memory_space<vmem>>, vector<8x1xf32>
      tpu.vector_store %arg6[%c0_43, %c0_44], %79 {strides = array<i32>} : memref<8x2xf32, #tpu.memory_space<vmem>>, vector<8x1xf32>,
      %c0_45 = arith.constant 0 : index
      %c1 = arith.constant 1 : index
      %88 = vector.load %arg6[%c0_45, %c1] : memref<8x2xf32, #tpu.memory_space<vmem>>, vector<8x1xf32>
      tpu.vector_store %arg6[%c0_45, %c1], %86 {strides = array<i32>} : memref<8x2xf32, #tpu.memory_space<vmem>>, vector<8x1xf32>,
    } else {
    }
    return
  }
  func.func @transform_0(%arg0: i32, %arg1: i32) -> (i32, i32) {
    %c0_i32 = arith.constant 0 : i32
    %c0_i32_0 = arith.constant 0 : i32
    return %arg0, %c0_i32 : i32, i32
  }
  func.func @transform_1(%arg0: i32, %arg1: i32) -> (i32, i32) {
    %c0_i32 = arith.constant 0 : i32
    %c0_i32_0 = arith.constant 0 : i32
    return %arg0, %c0_i32 : i32, i32
  }
  func.func @transform_2(%arg0: i32, %arg1: i32) -> (i32, i32) {
    %c0_i32 = arith.constant 0 : i32
    %c0_i32_0 = arith.constant 0 : i32
    return %arg1, %c0_i32 : i32, i32
  }
  func.func @transform_3(%arg0: i32, %arg1: i32) -> (i32, i32) {
    %c0_i32 = arith.constant 0 : i32
    %c0_i32_0 = arith.constant 0 : i32
    return %arg1, %c0_i32 : i32, i32
  }
  func.func @transform_4(%arg0: i32, %arg1: i32) -> (i32, i32) {
    %c0_i32 = arith.constant 0 : i32
    %c0_i32_0 = arith.constant 0 : i32
    return %arg0, %c0_i32 : i32, i32
  }
}

</mosaic_0001>

<llo_original>
// kernel: tpu_custom_call.1
$region0: #{tpu_custom_call.1}
  #allocation0 [shape = 'u32[]', space=smem, size = 0x4, offset = 0x4, fixed_abs, tag = 'smem constant byte address 0x4 - core index']
  #allocation1 [shape = 'u32[144,128]{1,0:T(1,128)}', space=vmem, size = 0x12000, scoped, tag = 'internal scratch']
  #allocation2 [shape = 'f32[8,1]{1,0:T(8,128)}', space=vmem, size = 0x1000, scoped, tag = 'scratch operand']
  #allocation3 [shape = 'f32[8,1]{1,0:T(8,128)}', space=vmem, size = 0x1000, scoped, tag = 'scratch operand']
  %s0 = inlined_call_operand.hbm [shape: f32[16,128], index: 0, kind: input, shape index: {}]
  %s1 = inlined_call_operand.hbm [shape: f32[16,128], index: 1, kind: input, shape index: {}]
  %s2 = inlined_call_operand.hbm [shape: f32[16,128], index: 2, kind: input, shape index: {}]
  %s3 = inlined_call_operand.hbm [shape: f32[16,128], index: 3, kind: input, shape index: {}]
  %s4 = inlined_call_operand.vmem [shape: f32[16,2], index: 4, kind: output, shape index: {}]
  %s5 = sld [smem:[#allocation0]]
  $region73: #{tpu_custom_call.1} parent=0
    _
  %s7 = ssub.s32 1, %s5
  %s8 = scalar_select 0, %s7, %s5
  $region1: #{tpu_custom_call.1} parent=0
    #allocation4 [shape = 'u8[8192]{0}', space=vmem, size = 0x2000, scoped, tag = 'input window, operand 0']
    #allocation5 [shape = 's32[2]{0}', space=sflag, size = 0x8, scoped, tag = 'scoped memory for tpu_custom_call.1']
    #allocation6 [shape = 'u8[8192]{0}', space=vmem, size = 0x2000, scoped, tag = 'input window, operand 1']
    #allocation7 [shape = 's32[2]{0}', space=sflag, size = 0x8, scoped, tag = 'scoped memory for tpu_custom_call.1']
    #allocation8 [shape = 'u8[8192]{0}', space=vmem, size = 0x2000, scoped, tag = 'input window, operand 2']
    #allocation9 [shape = 'u8[8192]{0}', space=vmem, size = 0x2000, scoped, tag = 'input window, operand 3']
    #allocation10 [shape = 's32[2]{0}', space=sflag, size = 0x8, scoped, tag = 'scoped memory for tpu_custom_call.1']
    %9 = vsyncpa [#allocation5], 0
    %s10 = scalar_lea.sflag [#allocation5], 1
    %11 = vsyncpa %s10, 0
    %12 = vsyncpa [#allocation7], 0
    %s13 = scalar_lea.sflag [#allocation7], 1
    %14 = vsyncpa %s13, 0
    %15 = vsyncpa [#allocation10], 0
    %s16 = scalar_lea.sflag [#allocation10], 1
    %17 = vsyncpa %s16, 0
    loop: start=0, step=1, limit=6
    $region2: #{tpu_custom_call.1} parent=1 // loop_pre_header
      _
    $region3: #{tpu_custom_call.1} parent=1 // loop_header
      %s19 = sphi 0, %s23
      %p20 = scmp.ge.s32.totalorder %s19, 6
      %s26 = sphi 0, %s38
      %s27 = sphi 0, %s34
      %s28 = sphi 0, %s26
      %s29 = sphi 0, %s27
      %s30 = sphi 0, %s28
      %s31 = sphi 0, %s29
      %s41 = sphi 0, %s43
      %s44 = sphi 0, %s41
      %s45 = sphi 0, %s44
      %s61 = sphi 0, %s45
      %s67 = sphi 0, %s69
      %s70 = sphi 0, %s67
      %s71 = sphi 0, %s70
      %s87 = sphi 0, %s71
      %s93 = sphi 0, %s95
      %s96 = sphi 0, %s93
      %s97 = sphi 0, %s96
      %s113 = sphi 0, %s97
      %s119 = sphi 0, %s121
      %s122 = sphi 0, %s119
      %s123 = sphi 0, %s122
      %s139 = sphi 0, %s123
      %s145 = sphi 0, %s147
      %s148 = sphi 0, %s145
      %s149 = sphi 0, %s148
      %s165 = sphi 0, %s149
    $region4: #{tpu_custom_call.1} parent=1 // loop_header_branch
      %22 = sbr.rel (%p20) target = $region8
    $region5: #{tpu_custom_call.1} parent=1 // loop_body
      %s24 = ssub.s32 %s19, 1
      %s25 = ssub.s32 %s19, 2
      %s32 = sadd.s32 1, %s27
      %p33 = scmp.ge.s32.totalorder %s32, 2
      %s34 = scalar_select %p33, 0, %s32
      %s35 = sadd.s32 1, %s26
      %s36 = scalar_select %p33, %s35, %s26
      %p37 = scmp.ge.s32.totalorder %s36, 2
      %s38 = scalar_select %p37, 0, %s36
      %s39 = ssub.s32 %s26, %s38
      %p40 = scmp.eq.s32.totalorder %s39, 0
      %s42 = sadd.s32 %s41, 1
      %s43 = scalar_select %p40, %s41, %s42
      %p46 = pneg %p40
      %p47 = scmp.eq.s32.totalorder %s19, 3
      %p48 = por %p46, %p47
      %p49 = scmp.ne.s32.totalorder %s41, %s44
      %p50 = scmp.eq.s32.totalorder %s19, 0
      %p51 = por %p49, %p50
      %p52 = scmp.ne.s32.totalorder %s41, %s44
      %p53 = scmp.eq.s32.totalorder %s24, 3
      %p54 = por %p52, %p53
      %p55 = scmp.ne.s32.totalorder %s44, %s45
      %p56 = scmp.eq.s32.totalorder %s24, 0
      %p57 = por %p55, %p56
      %p58 = scmp.ne.s32.totalorder %s44, %s45
      %p59 = scmp.eq.s32.totalorder %s25, 3
      %p60 = por %p58, %p59
      %p62 = scmp.ne.s32.totalorder %s45, %s61
      %p63 = scmp.eq.s32.totalorder %s25, 0
      %p64 = por %p62, %p63
      %s65 = ssub.s32 %s26, %s38
      %p66 = scmp.eq.s32.totalorder %s65, 0
      %s68 = sadd.s32 %s67, 1
      %s69 = scalar_select %p66, %s67, %s68
      %p72 = pneg %p66
      %p73 = scmp.eq.s32.totalorder %s19, 3
      %p74 = por %p72, %p73
      %p75 = scmp.ne.s32.totalorder %s67, %s70
      %p76 = scmp.eq.s32.totalorder %s19, 0
      %p77 = por %p75, %p76
      %p78 = scmp.ne.s32.totalorder %s67, %s70
      %p79 = scmp.eq.s32.totalorder %s24, 3
      %p80 = por %p78, %p79
      %p81 = scmp.ne.s32.totalorder %s70, %s71
      %p82 = scmp.eq.s32.totalorder %s24, 0
      %p83 = por %p81, %p82
      %p84 = scmp.ne.s32.totalorder %s70, %s71
      %p85 = scmp.eq.s32.totalorder %s25, 3
      %p86 = por %p84, %p85
      %p88 = scmp.ne.s32.totalorder %s71, %s87
      %p89 = scmp.eq.s32.totalorder %s25, 0
      %p90 = por %p88, %p89
      %s91 = ssub.s32 %s27, %s34
      %p92 = scmp.eq.s32.totalorder %s91, 0
      %s94 = sadd.s32 %s93, 1
      %s95 = scalar_select %p92, %s93, %s94
      %p98 = pneg %p92
      %p99 = scmp.eq.s32.totalorder %s19, 3
      %p100 = por %p98, %p99
      %p101 = scmp.ne.s32.totalorder %s93, %s96
      %p102 = scmp.eq.s32.totalorder %s19, 0
      %p103 = por %p101, %p102
      %p104 = scmp.ne.s32.totalorder %s93, %s96
      %p105 = scmp.eq.s32.totalorder %s24, 3
      %p106 = por %p104, %p105
      %p107 = scmp.ne.s32.totalorder %s96, %s97
      %p108 = scmp.eq.s32.totalorder %s24, 0
      %p109 = por %p107, %p108
      %p110 = scmp.ne.s32.totalorder %s96, %s97
      %p111 = scmp.eq.s32.totalorder %s25, 3
      %p112 = por %p110, %p111
      %p114 = scmp.ne.s32.totalorder %s97, %s113
      %p115 = scmp.eq.s32.totalorder %s25, 0
      %p116 = por %p114, %p115
      %s117 = ssub.s32 %s27, %s34
      %p118 = scmp.eq.s32.totalorder %s117, 0
      %s120 = sadd.s32 %s119, 1
      %s121 = scalar_select %p118, %s119, %s120
      %p124 = pneg %p118
      %p125 = scmp.eq.s32.totalorder %s19, 3
      %p126 = por %p124, %p125
      %p127 = scmp.ne.s32.totalorder %s119, %s122
      %p128 = scmp.eq.s32.totalorder %s19, 0
      %p129 = por %p127, %p128
      %p130 = scmp.ne.s32.totalorder %s119, %s122
      %p131 = scmp.eq.s32.totalorder %s24, 3
      %p132 = por %p130, %p131
      %p133 = scmp.ne.s32.totalorder %s122, %s123
      %p134 = scmp.eq.s32.totalorder %s24, 0
      %p135 = por %p133, %p134
      %p136 = scmp.ne.s32.totalorder %s122, %s123
      %p137 = scmp.eq.s32.totalorder %s25, 3
      %p138 = por %p136, %p137
      %p140 = scmp.ne.s32.totalorder %s123, %s139
      %p141 = scmp.eq.s32.totalorder %s25, 0
      %p142 = por %p140, %p141
      %s143 = ssub.s32 %s26, %s38
      %p144 = scmp.eq.s32.totalorder %s143, 0
      %s146 = sadd.s32 %s145, 1
      %s147 = scalar_select %p144, %s145, %s146
      %p150 = pneg %p144
      %p151 = scmp.eq.s32.totalorder %s19, 3
      %p152 = por %p150, %p151
      %p153 = scmp.ne.s32.totalorder %s145, %s148
      %p154 = scmp.eq.s32.totalorder %s19, 0
      %p155 = por %p153, %p154
      %p156 = scmp.ne.s32.totalorder %s145, %s148
      %p157 = scmp.eq.s32.totalorder %s24, 3
      %p158 = por %p156, %p157
      %p159 = scmp.ne.s32.totalorder %s148, %s149
      %p160 = scmp.eq.s32.totalorder %s24, 0
      %p161 = por %p159, %p160
      %p162 = scmp.ne.s32.totalorder %s148, %s149
      %p163 = scmp.eq.s32.totalorder %s25, 3
      %p164 = por %p162, %p163
      %p166 = scmp.ne.s32.totalorder %s149, %s165
      %p167 = scmp.eq.s32.totalorder %s25, 0
      %p168 = por %p166, %p167
      %p169 = scmp.le.s32.totalorder 1, %s19
      %p170 = scmp.lt.s32.totalorder %s19, 5
      %p171 = pnand %p169, %p170
      %p172 = pneg %p171
      // Predicated region
      $region9: #{tpu_custom_call.1} parent=5 // pred_check
        _
      $region10: #{tpu_custom_call.1} parent=5 // pred_check_branch
        %174 = sbr.rel (%p171) target = $region12
      $region11: #{tpu_custom_call.1} parent=5 // pred_region
        %s175 = ssub.s32 %s19, 1
      $region12: #{tpu_custom_call.1} parent=5 // pred_fallthru
        _
      %p176 = scmp.lt.s32.totalorder %s19, 4
      // Predicated region
      $region13: #{tpu_custom_call.1} parent=5 // pred_check
        %p177 = pneg %p176
      $region14: #{tpu_custom_call.1} parent=5 // pred_check_branch
        %179 = sbr.rel (%p177) target = $region16
      $region15: #{tpu_custom_call.1} parent=5 // pred_region
        // Predicated region
        $region17: #{tpu_custom_call.1} parent=15 // pred_check
          %p180 = pneg %p51
        $region18: #{tpu_custom_call.1} parent=15 // pred_check_branch
          %182 = sbr.rel (%p180) target = $region20
        $region19: #{tpu_custom_call.1} parent=15 // pred_region
          %s183 = sand.u32 %s41, 1
          %s184 = scalar_lea.sflag [#allocation5], %s183
          %s185 = sand.u32 %s41, 1
          %s186 = smul.addr %s185, 8
          %s187 = scalar_lea.vmem [#allocation4], %s186
          %s189 = ssub.s32 128, 128
          %190 = vsyncadd %s184, %s189
          %s191 = smul.addr %s26, 128
          %s192 = scalar_lea.hbm %s0, %s191
          %s194 = sshll.u32 %s187, 4
          %s195 = int_to_ptr.vmem [resolvable:$true] %s194
          %197 = dma.hbm_to_vmem [thread:$0]  %s192, 128, %s195, %s184
        $region20: #{tpu_custom_call.1} parent=15 // pred_fallthru
          _
        // Predicated region
        $region21: #{tpu_custom_call.1} parent=15 // pred_check
          %p198 = pneg %p77
        $region22: #{tpu_custom_call.1} parent=15 // pred_check_branch
          %200 = sbr.rel (%p198) target = $region24
        $region23: #{tpu_custom_call.1} parent=15 // pred_region
          %s201 = sand.u32 %s19, 1
          %s202 = scalar_lea.sflag [#allocation7], %s201
          %s203 = sand.u32 %s67, 1
          %s204 = smul.addr %s203, 8
          %s205 = scalar_lea.vmem [#allocation6], %s204
          %s207 = ssub.s32 128, 128
          %208 = vsyncadd %s202, %s207
          %s209 = smul.addr %s26, 128
          %s210 = scalar_lea.hbm %s1, %s209
          %s212 = sshll.u32 %s205, 4
          %s213 = int_to_ptr.vmem [resolvable:$true] %s212
          %215 = dma.hbm_to_vmem [thread:$0]  %s210, 128, %s213, %s202
        $region24: #{tpu_custom_call.1} parent=15 // pred_fallthru
          _
        // Predicated region
        $region25: #{tpu_custom_call.1} parent=15 // pred_check
          %p216 = pneg %p103
        $region26: #{tpu_custom_call.1} parent=15 // pred_check_branch
          %218 = sbr.rel (%p216) target = $region28
        $region27: #{tpu_custom_call.1} parent=15 // pred_region
          %s219 = sand.u32 %s19, 1
          %s220 = scalar_lea.sflag [#allocation7], %s219
          %s221 = sand.u32 %s93, 1
          %s222 = smul.addr %s221, 8
          %s223 = scalar_lea.vmem [#allocation8], %s222
          %s225 = ssub.s32 128, 128
          %226 = vsyncadd %s220, %s225
          %s227 = smul.addr %s27, 128
          %s228 = scalar_lea.hbm %s2, %s227
          %s230 = sshll.u32 %s223, 4
          %s231 = int_to_ptr.vmem [resolvable:$true] %s230
          %233 = dma.hbm_to_vmem [thread:$0]  %s228, 128, %s231, %s220
        $region28: #{tpu_custom_call.1} parent=15 // pred_fallthru
          _
        // Predicated region
        $region29: #{tpu_custom_call.1} parent=15 // pred_check
          %p234 = pneg %p129
        $region30: #{tpu_custom_call.1} parent=15 // pred_check_branch
          %236 = sbr.rel (%p234) target = $region32
        $region31: #{tpu_custom_call.1} parent=15 // pred_region
          %s237 = sand.u32 %s119, 1
          %s238 = scalar_lea.sflag [#allocation10], %s237
          %s239 = sand.u32 %s119, 1
          %s240 = smul.addr %s239, 8
          %s241 = scalar_lea.vmem [#allocation9], %s240
          %s243 = ssub.s32 128, 128
          %244 = vsyncadd %s238, %s243
          %s245 = smul.addr %s27, 128
          %s246 = scalar_lea.hbm %s3, %s245
          %s248 = sshll.u32 %s241, 4
          %s249 = int_to_ptr.vmem [resolvable:$true] %s248
          %251 = dma.hbm_to_vmem [thread:$0]  %s246, 128, %s249, %s238
        $region32: #{tpu_custom_call.1} parent=15 // pred_fallthru
          _
      $region16: #{tpu_custom_call.1} parent=5 // pred_fallthru
        _
      %p252 = scmp.le.s32.totalorder 1, %s19
      %p253 = scmp.lt.s32.totalorder %s19, 5
      %p254 = pnand %p252, %p253
      %p255 = pneg %p254
      // Predicated region
      $region33: #{tpu_custom_call.1} parent=5 // pred_check
        _
      $region34: #{tpu_custom_call.1} parent=5 // pred_check_branch
        %257 = sbr.rel (%p254) target = $region36
      $region35: #{tpu_custom_call.1} parent=5 // pred_region
        %s258 = ssub.s32 %s19, 1
        %s259 = sand.u32 %s44, 1
        %s260 = scalar_lea.sflag [#allocation5], %s259
        %s261 = sand.u32 %s44, 1
        %s262 = smul.addr %s261, 8
        %s263 = scalar_lea.vmem [#allocation4], %s262
        // Predicated region
        $region37: #{tpu_custom_call.1} parent=35 // pred_check
          %p264 = pneg %p57
        $region38: #{tpu_custom_call.1} parent=35 // pred_check_branch
          %266 = sbr.rel (%p264) target = $region40
        $region39: #{tpu_custom_call.1} parent=35 // pred_region
          %267 = dma.done %s260, 128
        $region40: #{tpu_custom_call.1} parent=35 // pred_fallthru
          _
        %s268 = sand.u32 %s24, 1
        %s269 = scalar_lea.sflag [#allocation7], %s268
        %s270 = sand.u32 %s70, 1
        %s271 = smul.addr %s270, 8
        %s272 = scalar_lea.vmem [#allocation6], %s271
        // Predicated region
        $region41: #{tpu_custom_call.1} parent=35 // pred_check
          %p273 = pneg %p83
        $region42: #{tpu_custom_call.1} parent=35 // pred_check_branch
          %275 = sbr.rel (%p273) target = $region44
        $region43: #{tpu_custom_call.1} parent=35 // pred_region
          %276 = dma.done %s269, 128
        $region44: #{tpu_custom_call.1} parent=35 // pred_fallthru
          _
        %s277 = sand.u32 %s24, 1
        %s278 = scalar_lea.sflag [#allocation7], %s277
        %s279 = sand.u32 %s96, 1
        %s280 = smul.addr %s279, 8
        %s281 = scalar_lea.vmem [#allocation8], %s280
        // Predicated region
        $region45: #{tpu_custom_call.1} parent=35 // pred_check
          %p282 = pneg %p109
        $region46: #{tpu_custom_call.1} parent=35 // pred_check_branch
          %284 = sbr.rel (%p282) target = $region48
        $region47: #{tpu_custom_call.1} parent=35 // pred_region
          %285 = dma.done %s278, 128
        $region48: #{tpu_custom_call.1} parent=35 // pred_fallthru
          _
        %s286 = sand.u32 %s122, 1
        %s287 = scalar_lea.sflag [#allocation10], %s286
        %s288 = sand.u32 %s122, 1
        %s289 = smul.addr %s288, 8
        %s290 = scalar_lea.vmem [#allocation9], %s289
        // Predicated region
        $region49: #{tpu_custom_call.1} parent=35 // pred_check
          %p291 = pneg %p135
        $region50: #{tpu_custom_call.1} parent=35 // pred_check_branch
          %293 = sbr.rel (%p291) target = $region52
        $region51: #{tpu_custom_call.1} parent=35 // pred_region
          %294 = dma.done %s287, 128
        $region52: #{tpu_custom_call.1} parent=35 // pred_fallthru
          _
        %s295 = sand.u32 %s44, 1
        %s296 = scalar_lea.sflag [#allocation5], %s295
        %s297 = sand.u32 %s44, 1
        %s298 = smul.addr %s297, 8
        %s299 = scalar_lea.vmem [#allocation4], %s298
        %p300 = pneg %p57
        %p301 = pneg %p54
        %s302 = sand.u32 %s24, 1
        %s303 = scalar_lea.sflag [#allocation7], %s302
        %s304 = sand.u32 %s70, 1
        %s305 = smul.addr %s304, 8
        %s306 = scalar_lea.vmem [#allocation6], %s305
        %p307 = pneg %p83
        %p308 = pneg %p80
        %s309 = sand.u32 %s24, 1
        %s310 = scalar_lea.sflag [#allocation7], %s309
        %s311 = sand.u32 %s96, 1
        %s312 = smul.addr %s311, 8
        %s313 = scalar_lea.vmem [#allocation8], %s312
        %p314 = pneg %p109
        %p315 = pneg %p106
        %s316 = sand.u32 %s122, 1
        %s317 = scalar_lea.sflag [#allocation10], %s316
        %s318 = sand.u32 %s122, 1
        %s319 = smul.addr %s318, 8
        %s320 = scalar_lea.vmem [#allocation9], %s319
        %p321 = pneg %p135
        %p322 = pneg %p132
        %p323 = pneg %p161
        %p324 = pneg %p158
        %p325 = scmp.lt.s32.totalorder %s28, 1
        %s326 = scalar_select %p325, %s28, 1
        %s327 = smul.addr %s326, 8
        %s328 = scalar_lea.vmem %s4, %s327
        %p329 = scmp.lt.s32.totalorder %s28, 1
        %s330 = scalar_select %p329, %s28, 1
        %s331 = smul.addr %s330, 8
        %s332 = scalar_lea.vmem %s4, %s331
        %p333 = scmp.eq.s32.totalorder %s29, 0
        // Predicated region
        $region53: #{tpu_custom_call.1} parent=35 // pred_check
          %p334 = pneg %p333
        $region54: #{tpu_custom_call.1} parent=35 // pred_check_branch
          %336 = sbr.rel (%p334) target = $region56
        $region55: #{tpu_custom_call.1} parent=35 // pred_region
          %vm337 = vcmask 7168
          %338 = vst.msk [vmem:[#allocation2] sm:$0xff] %vm337, 0.0
          %339 = vst.msk [vmem:[#allocation3] sm:$0xff] %vm337, 0.0
        $region56: #{tpu_custom_call.1} parent=35 // pred_fallthru
          _
        %v340 = vld [vmem:[%s263] sm:$0xff]
        %v341 = vmul.f32 %v340, %v340
        %342 = vadd.xlane.f32.xlu0 %v341
        %v343 = vpop.xlane.xlu0 %342
        %v344 = vmax.f32 %v343, 1e-24
        %v345 = vrsqrt.pop %v344
        %v346 = vmul.f32 %v340, %v345
        %v347 = vld [vmem:[%s272] sm:$0xff]
        %v348 = vmul.f32 %v347, %v347
        %349 = vadd.xlane.f32.xlu0 %v348
        %v350 = vpop.xlane.xlu0 %349
        %v351 = vmax.f32 %v350, 1e-24
        %v352 = vrsqrt.pop %v351
        %v353 = vmul.f32 %v347, %v352
        %v354 = vld [vmem:[%s281] sm:$0xff]
        %v355 = vmul.f32 %v354, %v354
        %356 = vadd.xlane.f32.xlu0 %v355
        %v357 = vpop.xlane.xlu0 %356
        %v358 = vmax.f32 %v357, 1e-24
        %v359 = vrsqrt.pop %v358
        %v360 = vmul.f32 %v354, %v359
        %v361 = vld [vmem:[%s290] sm:$0xff]
        %v362 = vmul.f32 %v361, %v361
        %363 = vadd.xlane.f32.xlu0 %v362
        %v364 = vpop.xlane.xlu0 %363
        %v365 = vmax.f32 %v364, 1e-24
        %v366 = vrsqrt.pop %v365
        %v367 = vmul.f32 %v361, %v366
        %368 = vmatprep.subr.mxu0 0.0
        %369 = vmatpush1.xpose.msra.mxu0 0.0
        %370 = vmatprep.subr.mxu0 0.0
        %371 = vmatpush1.xpose.msra.mxu0 0.0
        %372 = vmatprep.subr.mxu0 0.0
        %373 = vmatpush1.xpose.msra.mxu0 0.0
        %374 = vmatprep.subr.mxu0 0.0
        %375 = vmatpush1.xpose.msra.mxu0 0.0
        %376 = vmatprep.subr.mxu0 0.0
        %377 = vmatpush1.xpose.msra.mxu0 0.0
        %378 = vmatprep.subr.mxu0 0.0
        %379 = vmatpush1.xpose.msra.mxu0 0.0
        %380 = vmatprep.subr.mxu0 0.0
        %381 = vmatpush1.xpose.msra.mxu0 0.0
        %382 = vmatprep.subr.mxu0 0.0
        %383 = vmatpush1.xpose.msra.mxu0 0.0
        %384 = vmatprep.subr.mxu0 0.0
        %385 = vmatpush1.xpose.msra.mxu0 0.0
        %386 = vmatprep.subr.mxu0 0.0
        %387 = vmatpush1.xpose.msra.mxu0 0.0
        %388 = vmatprep.subr.mxu0 0.0
        %389 = vmatpush1.xpose.msra.mxu0 0.0
        %390 = vmatprep.subr.mxu0 0.0
        %391 = vmatpush1.xpose.msra.mxu0 0.0
        %392 = vmatprep.subr.mxu0 0.0
        %393 = vmatpush1.xpose.msra.mxu0 0.0
        %394 = vmatprep.subr.mxu0 0.0
        %395 = vmatpush1.xpose.msra.mxu0 0.0
        %396 = vmatprep.subr.mxu0 0.0
        %397 = vmatpush1.xpose.msra.mxu0 0.0
        %398 = vmatprep.subr.mxu0 0.0
        %399 = vmatpush1.xpose.msra.mxu0 %v360
        %400 = vmatprep.subr.mxu0 0.0
        %401 = vmatpush2.xpose.msra.mxu0 0.0
        %402 = vmatprep.subr.mxu0 0.0
        %403 = vmatpush2.xpose.msra.mxu0 0.0
        %404 = vmatprep.subr.mxu0 0.0
        %405 = vmatpush2.xpose.msra.mxu0 0.0
        %406 = vmatprep.subr.mxu0 0.0
        %407 = vmatpush2.xpose.msra.mxu0 0.0
        %408 = vmatprep.subr.mxu0 0.0
        %409 = vmatpush2.xpose.msra.mxu0 0.0
        %410 = vmatprep.subr.mxu0 0.0
        %411 = vmatpush2.xpose.msra.mxu0 0.0
        %412 = vmatprep.subr.mxu0 0.0
        %413 = vmatpush2.xpose.msra.mxu0 0.0
        %414 = vmatprep.subr.mxu0 0.0
        %415 = vmatpush2.xpose.msra.mxu0 0.0
        %416 = vmatprep.subr.mxu0 0.0
        %417 = vmatpush2.xpose.msra.mxu0 0.0
        %418 = vmatprep.subr.mxu0 0.0
        %419 = vmatpush2.xpose.msra.mxu0 0.0
        %420 = vmatprep.subr.mxu0 0.0
        %421 = vmatpush2.xpose.msra.mxu0 0.0
        %422 = vmatprep.subr.mxu0 0.0
        %423 = vmatpush2.xpose.msra.mxu0 0.0
        %424 = vmatprep.subr.mxu0 0.0
        %425 = vmatpush2.xpose.msra.mxu0 0.0
        %426 = vmatprep.subr.mxu0 0.0
        %427 = vmatpush2.xpose.msra.mxu0 0.0
        %428 = vmatprep.subr.mxu0 0.0
        %429 = vmatpush2.xpose.msra.mxu0 0.0
        %430 = vmatprep.subr.mxu0 0.0
        %431 = vmatpush2.xpose.msra.mxu0 0.0
        %432 = vmatprep.mubr.f32.mxu0 0.0
        %433 = vmatmul.mubr.f32.gmra.mxu0 %v346
        %v434 = vpop.f32.mrf.mxu0
        %v435 = vadd.f32 0.0, %v434
        %v436 = vpop.f32.mrf.mxu0
        %437 = vdwg.mxu0
        %438 = vmatprep.subr.mxu0 0.0
        %439 = vmatpush1.xpose.msra.mxu0 0.0
        %440 = vmatprep.subr.mxu0 0.0
        %441 = vmatpush1.xpose.msra.mxu0 0.0
        %442 = vmatprep.subr.mxu0 0.0
        %443 = vmatpush1.xpose.msra.mxu0 0.0
        %444 = vmatprep.subr.mxu0 0.0
        %445 = vmatpush1.xpose.msra.mxu0 0.0
        %446 = vmatprep.subr.mxu0 0.0
        %447 = vmatpush1.xpose.msra.mxu0 0.0
        %448 = vmatprep.subr.mxu0 0.0
        %449 = vmatpush1.xpose.msra.mxu0 0.0
        %450 = vmatprep.subr.mxu0 0.0
        %451 = vmatpush1.xpose.msra.mxu0 0.0
        %452 = vmatprep.subr.mxu0 0.0
        %453 = vmatpush1.xpose.msra.mxu0 0.0
        %454 = vmatprep.subr.mxu0 0.0
        %455 = vmatpush1.xpose.msra.mxu0 0.0
        %456 = vmatprep.subr.mxu0 0.0
        %457 = vmatpush1.xpose.msra.mxu0 0.0
        %458 = vmatprep.subr.mxu0 0.0
        %459 = vmatpush1.xpose.msra.mxu0 0.0
        %460 = vmatprep.subr.mxu0 0.0
        %461 = vmatpush1.xpose.msra.mxu0 0.0
        %462 = vmatprep.subr.mxu0 0.0
        %463 = vmatpush1.xpose.msra.mxu0 0.0
        %464 = vmatprep.subr.mxu0 0.0
        %465 = vmatpush1.xpose.msra.mxu0 0.0
        %466 = vmatprep.subr.mxu0 0.0
        %467 = vmatpush1.xpose.msra.mxu0 0.0
        %468 = vmatprep.subr.mxu0 0.0
        %469 = vmatpush1.xpose.msra.mxu0 %v367
        %470 = vmatprep.subr.mxu0 0.0
        %471 = vmatpush2.xpose.msra.mxu0 0.0
        %472 = vmatprep.subr.mxu0 0.0
        %473 = vmatpush2.xpose.msra.mxu0 0.0
        %474 = vmatprep.subr.mxu0 0.0
        %475 = vmatpush2.xpose.msra.mxu0 0.0
        %476 = vmatprep.subr.mxu0 0.0
        %477 = vmatpush2.xpose.msra.mxu0 0.0
        %478 = vmatprep.subr.mxu0 0.0
        %479 = vmatpush2.xpose.msra.mxu0 0.0
        %480 = vmatprep.subr.mxu0 0.0
        %481 = vmatpush2.xpose.msra.mxu0 0.0
        %482 = vmatprep.subr.mxu0 0.0
        %483 = vmatpush2.xpose.msra.mxu0 0.0
        %484 = vmatprep.subr.mxu0 0.0
        %485 = vmatpush2.xpose.msra.mxu0 0.0
        %486 = vmatprep.subr.mxu0 0.0
        %487 = vmatpush2.xpose.msra.mxu0 0.0
        %488 = vmatprep.subr.mxu0 0.0
        %489 = vmatpush2.xpose.msra.mxu0 0.0
        %490 = vmatprep.subr.mxu0 0.0
        %491 = vmatpush2.xpose.msra.mxu0 0.0
        %492 = vmatprep.subr.mxu0 0.0
        %493 = vmatpush2.xpose.msra.mxu0 0.0
        %494 = vmatprep.subr.mxu0 0.0
        %495 = vmatpush2.xpose.msra.mxu0 0.0
        %496 = vmatprep.subr.mxu0 0.0
        %497 = vmatpush2.xpose.msra.mxu0 0.0
        %498 = vmatprep.subr.mxu0 0.0
        %499 = vmatpush2.xpose.msra.mxu0 0.0
        %500 = vmatprep.subr.mxu0 0.0
        %501 = vmatpush2.xpose.msra.mxu0 0.0
        %502 = vmatprep.mubr.f32.mxu0 0.0
        %503 = vmatmul.mubr.f32.gmra.mxu0 %v346
        %v504 = vpop.f32.mrf.mxu0
        %v505 = vadd.f32 0.0, %v504
        %v506 = vpop.f32.mrf.mxu0
        %507 = vdwg.mxu0
        %508 = vmatprep.subr.mxu0 0.0
        %509 = vmatpush1.xpose.msra.mxu0 0.0
        %510 = vmatprep.subr.mxu0 0.0
        %511 = vmatpush1.xpose.msra.mxu0 0.0
        %512 = vmatprep.subr.mxu0 0.0
        %513 = vmatpush1.xpose.msra.mxu0 0.0
        %514 = vmatprep.subr.mxu0 0.0
        %515 = vmatpush1.xpose.msra.mxu0 0.0
        %516 = vmatprep.subr.mxu0 0.0
        %517 = vmatpush1.xpose.msra.mxu0 0.0
        %518 = vmatprep.subr.mxu0 0.0
        %519 = vmatpush1.xpose.msra.mxu0 0.0
        %520 = vmatprep.subr.mxu0 0.0
        %521 = vmatpush1.xpose.msra.mxu0 0.0
        %522 = vmatprep.subr.mxu0 0.0
        %523 = vmatpush1.xpose.msra.mxu0 0.0
        %524 = vmatprep.subr.mxu0 0.0
        %525 = vmatpush1.xpose.msra.mxu0 0.0
        %526 = vmatprep.subr.mxu0 0.0
        %527 = vmatpush1.xpose.msra.mxu0 0.0
        %528 = vmatprep.subr.mxu0 0.0
        %529 = vmatpush1.xpose.msra.mxu0 0.0
        %530 = vmatprep.subr.mxu0 0.0
        %531 = vmatpush1.xpose.msra.mxu0 0.0
        %532 = vmatprep.subr.mxu0 0.0
        %533 = vmatpush1.xpose.msra.mxu0 0.0
        %534 = vmatprep.subr.mxu0 0.0
        %535 = vmatpush1.xpose.msra.mxu0 0.0
        %536 = vmatprep.subr.mxu0 0.0
        %537 = vmatpush1.xpose.msra.mxu0 0.0
        %538 = vmatprep.subr.mxu0 0.0
        %539 = vmatpush1.xpose.msra.mxu0 %v360
        %540 = vmatprep.subr.mxu0 0.0
        %541 = vmatpush2.xpose.msra.mxu0 0.0
        %542 = vmatprep.subr.mxu0 0.0
        %543 = vmatpush2.xpose.msra.mxu0 0.0
        %544 = vmatprep.subr.mxu0 0.0
        %545 = vmatpush2.xpose.msra.mxu0 0.0
        %546 = vmatprep.subr.mxu0 0.0
        %547 = vmatpush2.xpose.msra.mxu0 0.0
        %548 = vmatprep.subr.mxu0 0.0
        %549 = vmatpush2.xpose.msra.mxu0 0.0
        %550 = vmatprep.subr.mxu0 0.0
        %551 = vmatpush2.xpose.msra.mxu0 0.0
        %552 = vmatprep.subr.mxu0 0.0
        %553 = vmatpush2.xpose.msra.mxu0 0.0
        %554 = vmatprep.subr.mxu0 0.0
        %555 = vmatpush2.xpose.msra.mxu0 0.0
        %556 = vmatprep.subr.mxu0 0.0
        %557 = vmatpush2.xpose.msra.mxu0 0.0
        %558 = vmatprep.subr.mxu0 0.0
        %559 = vmatpush2.xpose.msra.mxu0 0.0
        %560 = vmatprep.subr.mxu0 0.0
        %561 = vmatpush2.xpose.msra.mxu0 0.0
        %562 = vmatprep.subr.mxu0 0.0
        %563 = vmatpush2.xpose.msra.mxu0 0.0
        %564 = vmatprep.subr.mxu0 0.0
        %565 = vmatpush2.xpose.msra.mxu0 0.0
        %566 = vmatprep.subr.mxu0 0.0
        %567 = vmatpush2.xpose.msra.mxu0 0.0
        %568 = vmatprep.subr.mxu0 0.0
        %569 = vmatpush2.xpose.msra.mxu0 0.0
        %570 = vmatprep.subr.mxu0 0.0
        %571 = vmatpush2.xpose.msra.mxu0 0.0
        %572 = vmatprep.mubr.f32.mxu0 0.0
        %573 = vmatmul.mubr.f32.gmra.mxu0 %v353
        %v574 = vpop.f32.mrf.mxu0
        %v575 = vadd.f32 0.0, %v574
        %v576 = vpop.f32.mrf.mxu0
        %577 = vdwg.mxu0
        %578 = vmatprep.subr.mxu0 0.0
        %579 = vmatpush1.xpose.msra.mxu0 0.0
        %580 = vmatprep.subr.mxu0 0.0
        %581 = vmatpush1.xpose.msra.mxu0 0.0
        %582 = vmatprep.subr.mxu0 0.0
        %583 = vmatpush1.xpose.msra.mxu0 0.0
        %584 = vmatprep.subr.mxu0 0.0
        %585 = vmatpush1.xpose.msra.mxu0 0.0
        %586 = vmatprep.subr.mxu0 0.0
        %587 = vmatpush1.xpose.msra.mxu0 0.0
        %588 = vmatprep.subr.mxu0 0.0
        %589 = vmatpush1.xpose.msra.mxu0 0.0
        %590 = vmatprep.subr.mxu0 0.0
        %591 = vmatpush1.xpose.msra.mxu0 0.0
        %592 = vmatprep.subr.mxu0 0.0
        %593 = vmatpush1.xpose.msra.mxu0 0.0
        %594 = vmatprep.subr.mxu0 0.0
        %595 = vmatpush1.xpose.msra.mxu0 0.0
        %596 = vmatprep.subr.mxu0 0.0
        %597 = vmatpush1.xpose.msra.mxu0 0.0
        %598 = vmatprep.subr.mxu0 0.0
        %599 = vmatpush1.xpose.msra.mxu0 0.0
        %600 = vmatprep.subr.mxu0 0.0
        %601 = vmatpush1.xpose.msra.mxu0 0.0
        %602 = vmatprep.subr.mxu0 0.0
        %603 = vmatpush1.xpose.msra.mxu0 0.0
        %604 = vmatprep.subr.mxu0 0.0
        %605 = vmatpush1.xpose.msra.mxu0 0.0
        %606 = vmatprep.subr.mxu0 0.0
        %607 = vmatpush1.xpose.msra.mxu0 0.0
        %608 = vmatprep.subr.mxu0 0.0
        %609 = vmatpush1.xpose.msra.mxu0 %v367
        %610 = vmatprep.subr.mxu0 0.0
        %611 = vmatpush2.xpose.msra.mxu0 0.0
        %612 = vmatprep.subr.mxu0 0.0
        %613 = vmatpush2.xpose.msra.mxu0 0.0
        %614 = vmatprep.subr.mxu0 0.0
        %615 = vmatpush2.xpose.msra.mxu0 0.0
        %616 = vmatprep.subr.mxu0 0.0
        %617 = vmatpush2.xpose.msra.mxu0 0.0
        %618 = vmatprep.subr.mxu0 0.0
        %619 = vmatpush2.xpose.msra.mxu0 0.0
        %620 = vmatprep.subr.mxu0 0.0
        %621 = vmatpush2.xpose.msra.mxu0 0.0
        %622 = vmatprep.subr.mxu0 0.0
        %623 = vmatpush2.xpose.msra.mxu0 0.0
        %624 = vmatprep.subr.mxu0 0.0
        %625 = vmatpush2.xpose.msra.mxu0 0.0
        %626 = vmatprep.subr.mxu0 0.0
        %627 = vmatpush2.xpose.msra.mxu0 0.0
        %628 = vmatprep.subr.mxu0 0.0
        %629 = vmatpush2.xpose.msra.mxu0 0.0
        %630 = vmatprep.subr.mxu0 0.0
        %631 = vmatpush2.xpose.msra.mxu0 0.0
        %632 = vmatprep.subr.mxu0 0.0
        %633 = vmatpush2.xpose.msra.mxu0 0.0
        %634 = vmatprep.subr.mxu0 0.0
        %635 = vmatpush2.xpose.msra.mxu0 0.0
        %636 = vmatprep.subr.mxu0 0.0
        %637 = vmatpush2.xpose.msra.mxu0 0.0
        %638 = vmatprep.subr.mxu0 0.0
        %639 = vmatpush2.xpose.msra.mxu0 0.0
        %640 = vmatprep.subr.mxu0 0.0
        %641 = vmatpush2.xpose.msra.mxu0 0.0
        %642 = vmatprep.mubr.f32.mxu0 0.0
        %643 = vmatmul.mubr.f32.gmra.mxu0 %v353
        %v644 = vpop.f32.mrf.mxu0
        %v645 = vadd.f32 0.0, %v644
        %v646 = vpop.f32.mrf.mxu0
        %647 = vdwg.mxu0
        %v648 = vld [vmem:[#allocation2] sm:$0xff]
        %v649 = vmul.f32 %v435, 2.0
        %v650 = vmul.f32 %v649, 1.442695
        %v651 = vpow.pop %v650
        %v652 = vmul.f32 %v505, 2.0
        %v653 = vmul.f32 %v652, 1.442695
        %v654 = vpow.pop %v653
        %v655 = vadd.f32 %v651, %v654
        %vm656 = vcmask 64512
        %v657 = vsel %vm656, %v655, 0.0
        %658 = vadd.xlane.f32.xlu0 %v657
        %v659 = vpop.xlane.xlu0 %658
        %v660 = vadd.f32 %v648, %v659
        %vm661 = vcmask 7168
        %662 = vst.msk [vmem:[#allocation2] sm:$0xff] %vm661, %v660
        %v663 = vld [vmem:[#allocation3] sm:$0xff]
        %v664 = vmul.f32 %v575, 2.0
        %v665 = vmul.f32 %v664, 1.442695
        %v666 = vpow.pop %v665
        %v667 = vmul.f32 %v645, 2.0
        %v668 = vmul.f32 %v667, 1.442695
        %v669 = vpow.pop %v668
        %v670 = vadd.f32 %v666, %v669
        %v671 = vsel %vm656, %v670, 0.0
        %672 = vadd.xlane.f32.xlu0 %v671
        %v673 = vpop.xlane.xlu0 %672
        %v674 = vadd.f32 %v663, %v673
        %675 = vst.msk [vmem:[#allocation3] sm:$0xff] %vm661, %v674
        %p676 = scmp.eq.s32.totalorder %s29, 1
        // Predicated region
        $region57: #{tpu_custom_call.1} parent=35 // pred_check
          %p677 = pneg %p676
        $region58: #{tpu_custom_call.1} parent=35 // pred_check_branch
          %679 = sbr.rel (%p677) target = $region60
        $region59: #{tpu_custom_call.1} parent=35 // pred_region
          %v680 = vmul.f32 %v346, %v353
          %681 = vadd.xlane.f32.xlu0 %v680
          %v682 = vpop.xlane.xlu0 %681
          %v683 = vld [vmem:[#allocation2] sm:$0xff]
          %v684 = vsub.f32 %v683, 7.389056
          %v685 = vlog2.pop %v684
          %v686 = vmul.f32 %v685, 0.6931472
          %v687 = vmul.f32 %v682, 2.0
          %v688 = vsub.f32 %v686, %v687
          %v689 = vld [vmem:[#allocation3] sm:$0xff]
          %v690 = vsub.f32 %v689, 7.389056
          %v691 = vlog2.pop %v690
          %v692 = vmul.f32 %v691, 0.6931472
          %v693 = vsub.f32 %v692, %v687
          %694 = vst.msk [vmem:[%s332] sm:$0xff] %vm661, %v688
          %696 = vrot.lane.b32.xlu0 %v693, 1
          %v697 = vpop.permute.xlu0 %696
          %vm699 = vcmask 15368
          %700 = vst.msk [vmem:[%s332] sm:$0xff] %vm699, %v697
        $region60: #{tpu_custom_call.1} parent=35 // pred_fallthru
          _
        %p701 = scmp.lt.s32.totalorder %s28, 1
        %s702 = scalar_select %p701, %s28, 1
        %s703 = smul.addr %s702, 8
        %s704 = scalar_lea.vmem %s4, %s703
        // Predicated region
        $region61: #{tpu_custom_call.1} parent=35 // pred_check
          %p705 = pneg %p158
        $region62: #{tpu_custom_call.1} parent=35 // pred_check_branch
          %707 = sbr.rel (%p705) target = $region64
        $region63: #{tpu_custom_call.1} parent=35 // pred_region
          _
        $region64: #{tpu_custom_call.1} parent=35 // pred_fallthru
          _
      $region36: #{tpu_custom_call.1} parent=5 // pred_fallthru
        _
      %p708 = scmp.le.s32.totalorder 2, %s19
      // Predicated region
      $region65: #{tpu_custom_call.1} parent=5 // pred_check
        %p709 = pneg %p708
      $region66: #{tpu_custom_call.1} parent=5 // pred_check_branch
        %711 = sbr.rel (%p709) target = $region68
      $region67: #{tpu_custom_call.1} parent=5 // pred_region
        %s712 = ssub.s32 %s19, 2
        // Predicated region
        $region69: #{tpu_custom_call.1} parent=67 // pred_check
          %p713 = pneg %p164
        $region70: #{tpu_custom_call.1} parent=67 // pred_check_branch
          %715 = sbr.rel (%p713) target = $region72
        $region71: #{tpu_custom_call.1} parent=67 // pred_region
          %p716 = scmp.lt.s32.totalorder %s30, 1
          %s717 = scalar_select %p716, %s30, 1
          %s718 = smul.addr %s717, 8
          %s719 = scalar_lea.vmem %s4, %s718
        $region72: #{tpu_custom_call.1} parent=67 // pred_fallthru
          _
      $region68: #{tpu_custom_call.1} parent=5 // pred_fallthru
        _
    $region6: #{tpu_custom_call.1} parent=1 // loop_footer
      %s23 = sadd.s32 1, %s19
    $region7: #{tpu_custom_call.1} parent=1 // loop_footer_branch
      %18 = sbr.rel target = $region3
    $region8: #{tpu_custom_call.1} parent=1 // loop_exit
      _
    %720 = vsyncpa [#allocation5], 1
    %s721 = scalar_lea.sflag [#allocation5], 1
    %722 = vsyncpa %s721, 1
    %723 = vsyncpa [#allocation7], 1
    %s724 = scalar_lea.sflag [#allocation7], 1
    %725 = vsyncpa %s724, 1
    %726 = vsyncpa [#allocation10], 1
    %s727 = scalar_lea.sflag [#allocation10], 1
    %728 = vsyncpa %s727, 1

</llo_original>
